<compile_context>
chip_gen: v7x
topology: tpu7x:2x2x1
jax: 0.10.0
libtpu: 0.0.40
codegen_flags: <defaults>
</compile_context>

<pallas_src>
import jax
import jax.numpy as jnp
from jax.experimental import pallas as pl
from jax.experimental.pallas import tpu as pltpu


def _round_up(x: int, m: int) -> int:
    return (x + m - 1) // m * m


def _downsample_gemm_kernel(xcol_ref, w_ref, b_ref, o_ref):
    """One (batch, spatial-tile) grid step: o = W @ xcol + b.

    xcol_ref : (1, K, TN)   bf16  im2col patches, K = C_in * 27, TN lane-dense
    w_ref    : (C_out, K)   bf16  conv weight, pre-reshaped (no transposes)
    b_ref    : (C_out, 1)   f32
    o_ref    : (1, C_out, TN) f32
    """
    acc = jnp.dot(w_ref[...], xcol_ref[0],
                  preferred_element_type=jnp.float32)      # MXU, bf16 in / f32 acc
    o_ref[0] = (acc + b_ref[...]).astype(o_ref.dtype)


def _pick_spatial_tile(S, K, C, *, vmem_budget=20 * 1024 * 1024, cap=2048):
    """Pick a lane-dense (multiple of 128) spatial tile and the padded S.

    Budget counts the double-buffered bf16 xcol tile, double-buffered f32
    output tile and the resident weight/bias blocks, so the same choice stays
    inside v7x's smaller VMEM as well as the v5e/v6e scoped limits.
    """
    per_col = 2 * (K * 2) + 2 * (C * 4)          # bytes per extra tn column
    fixed = K * C * 2 + C * 4                    # resident weight + bias
    tn_cap = max(128, (vmem_budget - fixed) // per_col)
    tn = min(cap, _round_up(S, 128), (tn_cap // 128) * 128)
    tn = max(128, (tn // 128) * 128)
    s_pad = _round_up(S, tn)
    # v7x megacore: prefer >=2 spatial tiles so both TensorCores get work.
    while s_pad // tn < 2 and tn > 128:
        tn = max(128, ((tn // 2) // 128) * 128)
        s_pad = _round_up(S, tn)
    return tn, s_pad


@jax.jit
def downsample(x, weight, bias):
    """Conv3d(C, C, kernel_size=3, stride=2, padding=1) forward.

    x:      (B, C, D, H, W) float32
    weight: (C, C, 3, 3, 3) float32 (PyTorch OIDHW layout)
    bias:   (C,) float32
    returns (B, C, Do, Ho, Wo) float32
    """
    B, C, D, H, W = x.shape
    Do, Ho, Wo = (D - 1) // 2 + 1, (H - 1) // 2 + 1, (W - 1) // 2 + 1
    S = Do * Ho * Wo
    K = C * 27

    # ---- im2col gather in bf16 (cast before the gather: half the traffic).
    # Row order (ci, kd, kh, kw) matches weight.reshape(C, 27*C): no transpose.
    xb = x.astype(jnp.bfloat16)
    xp = jnp.pad(xb, ((0, 0), (0, 0), (1, 1), (1, 1), (1, 1)))
    taps = []
    for kd in range(3):
        for kh in range(3):
            for kw in range(3):
                t = xp[:, :, kd::2, kh::2, kw::2][:, :, :Do, :Ho, :Wo]
                taps.append(t.reshape(B, C, 1, S))
    xcol = jnp.concatenate(taps, axis=2).reshape(B, K, S)   # (B, 27C, S) bf16

    # ---- lane-dense spatial tiling: pad S up to a multiple of the tile.
    tn, s_pad = _pick_spatial_tile(S, K, C)
    if s_pad != S:
        xcol = jnp.pad(xcol, ((0, 0), (0, 0), (0, s_pad - S)))
    n_tiles = s_pad // tn

    w2 = weight.reshape(C, K).astype(jnp.bfloat16)
    b2 = bias.reshape(C, 1).astype(jnp.float32)

    flops = 2 * B * C * K * s_pad
    bytes_accessed = (B * K * s_pad * 2      # xcol (bf16)
                      + C * K * 2            # weight (bf16)
                      + C * 4                # bias (f32)
                      + B * C * s_pad * 4)   # output (f32)

    out = pl.pallas_call(
        _downsample_gemm_kernel,
        out_shape=jax.ShapeDtypeStruct((B, C, s_pad), jnp.float32),
        grid_spec=pltpu.PrefetchScalarGridSpec(
            num_scalar_prefetch=0,
            grid=(B, n_tiles),
            in_specs=[
                pl.BlockSpec((1, K, tn), lambda b, n: (b, 0, n)),
                pl.BlockSpec((C, K), lambda b, n: (0, 0)),
                pl.BlockSpec((C, 1), lambda b, n: (0, 0)),
            ],
            out_specs=pl.BlockSpec((1, C, tn), lambda b, n: (b, 0, n)),
        ),
        compiler_params=pltpu.CompilerParams(
            dimension_semantics=("parallel", "parallel"),
            vmem_limit_bytes=40 * 1024 * 1024,
            # Let XLA fuse the pad/slice/concat producer of xcol into the
            # pallas_call input pipeline (avoids materializing xcol in HBM).
            allow_input_fusion=[True, False, False],
        ),
        cost_estimate=pl.CostEstimate(
            flops=flops, transcendentals=0, bytes_accessed=bytes_accessed),
    )(xcol, w2, b2)

    out = out[:, :, :S]
    return out.reshape(B, C, Do, Ho, Wo)


def downsample_ref(x, weight, bias):
    """Pure-JAX reference mirroring the PyTorch Conv3d forward (f32)."""
    out = jax.lax.conv_general_dilated(
        x, weight,
        window_strides=(2, 2, 2),
        padding=((1, 1), (1, 1), (1, 1)),
        dimension_numbers=("NCDHW", "OIDHW", "NCDHW"))
    return out + bias[None, :, None, None, None]


def _check(B, C, D, H, W, key):
    kx, kw, kb = jax.random.split(key, 3)
    x = jax.random.normal(kx, (B, C, D, H, W), jnp.float32)
    fan_in = C * 27
    weight = jax.random.normal(kw, (C, C, 3, 3, 3), jnp.float32) / jnp.sqrt(fan_in)
    bias = 0.1 * jax.random.normal(kb, (C,), jnp.float32)

    out = jax.block_until_ready(downsample(x, weight, bias))
    ref = downsample_ref(x, weight, bias)

    Do, Ho, Wo = (D - 1) // 2 + 1, (H - 1) // 2 + 1, (W - 1) // 2 + 1
    assert out.shape == ref.shape == (B, C, Do, Ho, Wo)
    max_err = float(jnp.max(jnp.abs(out - ref)))
    # bf16 matmul operands with f32 accumulation -> small rounding error.
    assert jnp.allclose(out, ref, rtol=3e-2, atol=3e-2), max_err


if __name__ == "__main__":
    key = jax.random.PRNGKey(0)
    k0, k1 = jax.random.split(key)

    # Lane-aligned case: output spatial 8x8x8 -> S = 512 (two 256-wide tiles).
    _check(B=2, C=16, D=16, H=16, W=16, key=k0)
    # Ragged case: odd spatial 9x9x9 -> S = 125, padded up to 128 lanes.
    _check(B=1, C=8, D=9, H=9, W=9, key=k1)

    print("KERNEL_OK")
</pallas_src>

<mosaic_0001>
module attributes {stable_mosaic.version = 11 : i64} {
  func.func @_downsample_gemm_kernel(%arg0: i32, %arg1: i32, %arg2: memref<1x432x256xbf16, #tpu.memory_space<vmem>>, %arg3: memref<16x432xbf16, #tpu.memory_space<vmem>>, %arg4: memref<16x1xf32, #tpu.memory_space<vmem>>, %arg5: memref<1x16x256xf32, #tpu.memory_space<vmem>>) attributes {dimension_semantics = [#tpu.dimension_semantics<parallel>, #tpu.dimension_semantics<parallel>], iteration_bounds = array<i64: 2, 2>, scalar_prefetch = 0 : i64, scratch_operands = 0 : i64, tpu.core_type = #tpu.core_type<tc>, window_params = [{transform_indices = @transform_0, window_bounds = array<i64: 1, 432, 256>}, {pipeline_mode = #tpu.pipeline_mode<synchronous>, transform_indices = @transform_1, window_bounds = array<i64: 16, 432>}, {pipeline_mode = #tpu.pipeline_mode<synchronous>, transform_indices = @transform_2, window_bounds = array<i64: 16, 1>}, {transform_indices = @transform_3, window_bounds = array<i64: 1, 16, 256>}]} {
    %c0 = arith.constant 0 : index
    %c0_0 = arith.constant 0 : index
    %0 = vector.load %arg3[%c0, %c0_0] : memref<16x432xbf16, #tpu.memory_space<vmem>>, vector<16x432xbf16>
    %c0_1 = arith.constant 0 : index
    %c0_2 = arith.constant 0 : index
    %c0_3 = arith.constant 0 : index
    %1 = vector.load %arg2[%c0_1, %c0_2, %c0_3] : memref<1x432x256xbf16, #tpu.memory_space<vmem>>, vector<1x432x256xbf16>
    %2 = vector.shape_cast %1 : vector<1x432x256xbf16> to vector<432x256xbf16>
    %cst = arith.constant dense<0.000000e+00> : vector<16x256xf32>
    %3 = tpu.matmul %0, %2, %cst {dimension_numbers = #tpu.dot_dimension_numbers<[1], [0], [0], [1], [0, 0, 1, 1], [], []>} : vector<16x432xbf16>, vector<432x256xbf16>, vector<16x256xf32> -> vector<16x256xf32>
    %c0_4 = arith.constant 0 : index
    %c0_5 = arith.constant 0 : index
    %4 = vector.load %arg4[%c0_4, %c0_5] : memref<16x1xf32, #tpu.memory_space<vmem>>, vector<16x1xf32>
    %5 = vector.broadcast %4 : vector<16x1xf32> to vector<16x256xf32>
    %6 = arith.addf %3, %5 : vector<16x256xf32>
    %c0_6 = arith.constant 0 : index
    %c0_7 = arith.constant 0 : index
    %c0_8 = arith.constant 0 : index
    %7 = vector.load %arg5[%c0_6, %c0_7, %c0_8] : memref<1x16x256xf32, #tpu.memory_space<vmem>>, vector<1x16x256xf32>
    %8 = vector.shape_cast %7 : vector<1x16x256xf32> to vector<16x256xf32>
    %9 = vector.shape_cast %6 : vector<16x256xf32> to vector<1x16x256xf32>
    tpu.vector_store %arg5[%c0_6, %c0_7, %c0_8], %9 {strides = array<i32>} : memref<1x16x256xf32, #tpu.memory_space<vmem>>, vector<1x16x256xf32>,
    return
  }
  func.func @transform_0(%arg0: i32, %arg1: i32) -> (i32, i32, i32) {
    %c0_i32 = arith.constant 0 : i32
    %c0_i32_0 = arith.constant 0 : i32
    return %arg0, %c0_i32, %arg1 : i32, i32, i32
  }
  func.func @transform_1(%arg0: i32, %arg1: i32) -> (i32, i32) {
    %c0_i32 = arith.constant 0 : i32
    %c0_i32_0 = arith.constant 0 : i32
    %c0_i32_1 = arith.constant 0 : i32
    return %c0_i32, %c0_i32_0 : i32, i32
  }
  func.func @transform_2(%arg0: i32, %arg1: i32) -> (i32, i32) {
    %c0_i32 = arith.constant 0 : i32
    %c0_i32_0 = arith.constant 0 : i32
    %c0_i32_1 = arith.constant 0 : i32
    return %c0_i32, %c0_i32_0 : i32, i32
  }
  func.func @transform_3(%arg0: i32, %arg1: i32) -> (i32, i32, i32) {
    %c0_i32 = arith.constant 0 : i32
    %c0_i32_0 = arith.constant 0 : i32
    return %arg0, %c0_i32, %arg1 : i32, i32, i32
  }
}

</mosaic_0001>

<llo_original>
// kernel: downsample.1
$region0: #{downsample.1}
  #allocation0 [shape = 'u32[]', space=smem, size = 0x4, offset = 0x4, fixed_abs, tag = 'smem constant byte address 0x4 - core index']
  #allocation1 [shape = 'u32[144,128]{1,0:T(1,128)}', space=vmem, size = 0x12000, scoped, tag = 'internal scratch']
  %s0 = inlined_call_operand.vmem [shape: bf16[2,432,512], index: 0, kind: input, shape index: {}]
  %s1 = inlined_call_operand.vmem [shape: bf16[16,432], index: 1, kind: input, shape index: {}]
  %s2 = inlined_call_operand.vmem [shape: f32[16,1], index: 2, kind: input, shape index: {}]
  %s3 = inlined_call_operand.vmem [shape: f32[2,16,512], index: 3, kind: output, shape index: {}]
  %s4 = sld [smem:[#allocation0]]
  $region102: #{downsample.1} parent=0
    _
  %s6 = ssub.s32 1, %s4
  %s7 = scalar_select 0, %s6, %s4
  $region1: #{downsample.1} parent=0
    #allocation2 [shape = 'u8[442368]{0}', space=vmem, size = 0x6c000, scoped, tag = 'input window, operand 0']
    #allocation3 [shape = 'u8[32768]{0}', space=vmem, size = 0x8000, scoped, tag = 'output window, operand 0']
    loop: start=0, step=1, limit=6
    $region2: #{downsample.1} parent=1 // loop_pre_header
      _
    $region3: #{downsample.1} parent=1 // loop_header
      %s9 = sphi 0, %s13
      %p10 = scmp.ge.s32.totalorder %s9, 6
      %s16 = sphi 0, %s28
      %s17 = sphi 0, %s24
      %s18 = sphi 0, %s16
      %s19 = sphi 0, %s17
      %s20 = sphi 0, %s18
      %s21 = sphi 0, %s19
      %s33 = sphi 0, %s35
      %s36 = sphi 0, %s33
      %s37 = sphi 0, %s36
      %s53 = sphi 0, %s37
      %s57 = sphi 0, %s57
      %s59 = sphi 0, %s57
      %s60 = sphi 0, %s59
      %s74 = sphi 0, %s60
      %s78 = sphi 0, %s78
      %s80 = sphi 0, %s78
      %s81 = sphi 0, %s80
      %s95 = sphi 0, %s81
      %s103 = sphi 0, %s105
      %s106 = sphi 0, %s103
      %s107 = sphi 0, %s106
      %s123 = sphi 0, %s107
    $region4: #{downsample.1} parent=1 // loop_header_branch
      %12 = sbr.rel (%p10) target = $region8
    $region5: #{downsample.1} parent=1 // loop_body
      %s14 = ssub.s32 %s9, 1
      %s15 = ssub.s32 %s9, 2
      %s22 = sadd.s32 1, %s17
      %p23 = scmp.ge.s32.totalorder %s22, 2
      %s24 = scalar_select %p23, 0, %s22
      %s25 = sadd.s32 1, %s16
      %s26 = scalar_select %p23, %s25, %s16
      %p27 = scmp.ge.s32.totalorder %s26, 2
      %s28 = scalar_select %p27, 0, %s26
      %s29 = ssub.s32 %s16, %s28
      %s30 = ssub.s32 %s17, %s24
      %s31 = sor.u32 %s29, %s30
      %p32 = scmp.eq.s32.totalorder %s31, 0
      %s34 = sadd.s32 %s33, 1
      %s35 = scalar_select %p32, %s33, %s34
      %p38 = pneg %p32
      %p39 = scmp.eq.s32.totalorder %s9, 3
      %p40 = por %p38, %p39
      %p41 = scmp.ne.s32.totalorder %s33, %s36
      %p42 = scmp.eq.s32.totalorder %s9, 0
      %p43 = por %p41, %p42
      %p44 = scmp.ne.s32.totalorder %s33, %s36
      %p45 = scmp.eq.s32.totalorder %s14, 3
      %p46 = por %p44, %p45
      %p47 = scmp.ne.s32.totalorder %s36, %s37
      %p48 = scmp.eq.s32.totalorder %s14, 0
      %p49 = por %p47, %p48
      %p50 = scmp.ne.s32.totalorder %s36, %s37
      %p51 = scmp.eq.s32.totalorder %s15, 3
      %p52 = por %p50, %p51
      %p54 = scmp.ne.s32.totalorder %s37, %s53
      %p55 = scmp.eq.s32.totalorder %s15, 0
      %p56 = por %p54, %p55
      %s58 = sadd.s32 %s57, 1
      %p61 = scmp.eq.s32.totalorder %s9, 3
      %p62 = scmp.ne.s32.totalorder %s57, %s59
      %p63 = scmp.eq.s32.totalorder %s9, 0
      %p64 = por %p62, %p63
      %p65 = scmp.ne.s32.totalorder %s57, %s59
      %p66 = scmp.eq.s32.totalorder %s14, 3
      %p67 = por %p65, %p66
      %p68 = scmp.ne.s32.totalorder %s59, %s60
      %p69 = scmp.eq.s32.totalorder %s14, 0
      %p70 = por %p68, %p69
      %p71 = scmp.ne.s32.totalorder %s59, %s60
      %p72 = scmp.eq.s32.totalorder %s15, 3
      %p73 = por %p71, %p72
      %p75 = scmp.ne.s32.totalorder %s60, %s74
      %p76 = scmp.eq.s32.totalorder %s15, 0
      %p77 = por %p75, %p76
      %s79 = sadd.s32 %s78, 1
      %p82 = scmp.eq.s32.totalorder %s9, 3
      %p83 = scmp.ne.s32.totalorder %s78, %s80
      %p84 = scmp.eq.s32.totalorder %s9, 0
      %p85 = por %p83, %p84
      %p86 = scmp.ne.s32.totalorder %s78, %s80
      %p87 = scmp.eq.s32.totalorder %s14, 3
      %p88 = por %p86, %p87
      %p89 = scmp.ne.s32.totalorder %s80, %s81
      %p90 = scmp.eq.s32.totalorder %s14, 0
      %p91 = por %p89, %p90
      %p92 = scmp.ne.s32.totalorder %s80, %s81
      %p93 = scmp.eq.s32.totalorder %s15, 3
      %p94 = por %p92, %p93
      %p96 = scmp.ne.s32.totalorder %s81, %s95
      %p97 = scmp.eq.s32.totalorder %s15, 0
      %p98 = por %p96, %p97
      %s99 = ssub.s32 %s16, %s28
      %s100 = ssub.s32 %s17, %s24
      %s101 = sor.u32 %s99, %s100
      %p102 = scmp.eq.s32.totalorder %s101, 0
      %s104 = sadd.s32 %s103, 1
      %s105 = scalar_select %p102, %s103, %s104
      %p108 = pneg %p102
      %p109 = scmp.eq.s32.totalorder %s9, 3
      %p110 = por %p108, %p109
      %p111 = scmp.ne.s32.totalorder %s103, %s106
      %p112 = scmp.eq.s32.totalorder %s9, 0
      %p113 = por %p111, %p112
      %p114 = scmp.ne.s32.totalorder %s103, %s106
      %p115 = scmp.eq.s32.totalorder %s14, 3
      %p116 = por %p114, %p115
      %p117 = scmp.ne.s32.totalorder %s106, %s107
      %p118 = scmp.eq.s32.totalorder %s14, 0
      %p119 = por %p117, %p118
      %p120 = scmp.ne.s32.totalorder %s106, %s107
      %p121 = scmp.eq.s32.totalorder %s15, 3
      %p122 = por %p120, %p121
      %p124 = scmp.ne.s32.totalorder %s107, %s123
      %p125 = scmp.eq.s32.totalorder %s15, 0
      %p126 = por %p124, %p125
      %p127 = scmp.le.s32.totalorder 1, %s9
      %p128 = scmp.lt.s32.totalorder %s9, 5
      %p129 = pnand %p127, %p128
      %p130 = pneg %p129
      // Predicated region
      $region9: #{downsample.1} parent=5 // pred_check
        _
      $region10: #{downsample.1} parent=5 // pred_check_branch
        %132 = sbr.rel (%p129) target = $region12
      $region11: #{downsample.1} parent=5 // pred_region
        %s133 = ssub.s32 %s9, 1
        // Predicated region
        $region13: #{downsample.1} parent=11 // pred_check
          %p134 = pneg %p70
        $region14: #{downsample.1} parent=11 // pred_check_branch
          %136 = sbr.rel (%p134) target = $region16
        $region15: #{downsample.1} parent=11 // pred_region
          _
        $region16: #{downsample.1} parent=11 // pred_fallthru
          _
        // Predicated region
        $region17: #{downsample.1} parent=11 // pred_check
          %p137 = pneg %p91
        $region18: #{downsample.1} parent=11 // pred_check_branch
          %139 = sbr.rel (%p137) target = $region20
        $region19: #{downsample.1} parent=11 // pred_region
          _
        $region20: #{downsample.1} parent=11 // pred_fallthru
          _
      $region12: #{downsample.1} parent=5 // pred_fallthru
        _
      %p140 = scmp.lt.s32.totalorder %s9, 4
      // Predicated region
      $region21: #{downsample.1} parent=5 // pred_check
        %p141 = pneg %p140
      $region22: #{downsample.1} parent=5 // pred_check_branch
        %143 = sbr.rel (%p141) target = $region24
      $region23: #{downsample.1} parent=5 // pred_region
        // Predicated region
        $region25: #{downsample.1} parent=23 // pred_check
          %p144 = pneg %p43
        $region26: #{downsample.1} parent=23 // pred_check_branch
          %146 = sbr.rel (%p144) target = $region28
        $region27: #{downsample.1} parent=23 // pred_region
          %s147 = sand.u32 %s33, 1
          %s148 = sand.u32 %s33, 1
          %s149 = smul.addr %s148, 432
          %s150 = scalar_lea.vmem [#allocation2], %s149
          %s151 = smul.u32 2, %s17
          %s152 = smul.addr %s16, 216
          %s153 = sadd.s32 %s151, %s152
          %s154 = smul.addr %s153, 4
          %s155 = scalar_lea.vmem %s0, %s154
          // Predicated region
          $region29: #{downsample.1} parent=27 // pred_check
            _
          $region30: #{downsample.1} parent=27 // pred_check_branch
            %157 = sbr.rel (0) target = $region32
          $region31: #{downsample.1} parent=27 // pred_region
            // Predicated region
            $region33: #{downsample.1} parent=31 // pred_check
              _
            $region34: #{downsample.1} parent=31 // pred_check_branch
              %159 = sbr.rel (0) target = $region36
            $region35: #{downsample.1} parent=31 // pred_region
              // Predicated region
              $region48: #{downsample.1} parent=35 // pred_check
                _
              $region49: #{downsample.1} parent=35 // pred_check_branch
                %280 = sbr.rel (0) target = $region51
              $region50: #{downsample.1} parent=35 // pred_region
                loop: start=0, step=1, limit=1
                $region52: #{downsample.1} parent=50 // loop_pre_header
                  _
                $region53: #{downsample.1} parent=50 // loop_header
                  %s282 = sphi 0, %s286
                  %p283 = scmp.ge.s32.totalorder %s282, 1
                  %s287 = sphi %s155, %s155
                  %s288 = sphi %s150, %s150
                $region54: #{downsample.1} parent=50 // loop_header_branch
                  %285 = sbr.rel (%p283) target = $region58
                $region55: #{downsample.1} parent=50 // loop_body
                  %v289 = vld [vmem:[%s287] sm:$0xff]
                  %290 = vst [vmem:[%s288] sm:$0xff] %v289
                  %v291 = vld [vmem:[%s287 + $0x10] sm:$0xff]
                  %292 = vst [vmem:[%s288 + $0x8] sm:$0xff] %v291
                  %v293 = vld [vmem:[%s287 + $0x20] sm:$0xff]
                  %294 = vst [vmem:[%s288 + $0x10] sm:$0xff] %v293
                  %v295 = vld [vmem:[%s287 + $0x30] sm:$0xff]
                  %296 = vst [vmem:[%s288 + $0x18] sm:$0xff] %v295
                  %v297 = vld [vmem:[%s287 + $0x40] sm:$0xff]
                  %298 = vst [vmem:[%s288 + $0x20] sm:$0xff] %v297
                  %v299 = vld [vmem:[%s287 + $0x50] sm:$0xff]
                  %300 = vst [vmem:[%s288 + $0x28] sm:$0xff] %v299
                  %v301 = vld [vmem:[%s287 + $0x60] sm:$0xff]
                  %302 = vst [vmem:[%s288 + $0x30] sm:$0xff] %v301
                  %v303 = vld [vmem:[%s287 + $0x70] sm:$0xff]
                  %304 = vst [vmem:[%s288 + $0x38] sm:$0xff] %v303
                  %v305 = vld [vmem:[%s287 + $0x80] sm:$0xff]
                  %306 = vst [vmem:[%s288 + $0x40] sm:$0xff] %v305
                  %v307 = vld [vmem:[%s287 + $0x90] sm:$0xff]
                  %308 = vst [vmem:[%s288 + $0x48] sm:$0xff] %v307
                  %v309 = vld [vmem:[%s287 + $0xa0] sm:$0xff]
                  %310 = vst [vmem:[%s288 + $0x50] sm:$0xff] %v309
                  %v311 = vld [vmem:[%s287 + $0xb0] sm:$0xff]
                  %312 = vst [vmem:[%s288 + $0x58] sm:$0xff] %v311
                  %v313 = vld [vmem:[%s287 + $0xc0] sm:$0xff]
                  %314 = vst [vmem:[%s288 + $0x60] sm:$0xff] %v313
                  %v315 = vld [vmem:[%s287 + $0xd0] sm:$0xff]
                  %316 = vst [vmem:[%s288 + $0x68] sm:$0xff] %v315
                  %v317 = vld [vmem:[%s287 + $0xe0] sm:$0xff]
                  %318 = vst [vmem:[%s288 + $0x70] sm:$0xff] %v317
                  %v319 = vld [vmem:[%s287 + $0xf0] sm:$0xff]
                  %320 = vst [vmem:[%s288 + $0x78] sm:$0xff] %v319
                  %v321 = vld [vmem:[%s287 + $0x100] sm:$0xff]
                  %322 = vst [vmem:[%s288 + $0x80] sm:$0xff] %v321
                  %v323 = vld [vmem:[%s287 + $0x110] sm:$0xff]
                  %324 = vst [vmem:[%s288 + $0x88] sm:$0xff] %v323
                  %v325 = vld [vmem:[%s287 + $0x120] sm:$0xff]
                  %326 = vst [vmem:[%s288 + $0x90] sm:$0xff] %v325
                  %v327 = vld [vmem:[%s287 + $0x130] sm:$0xff]
                  %328 = vst [vmem:[%s288 + $0x98] sm:$0xff] %v327
                  %v329 = vld [vmem:[%s287 + $0x140] sm:$0xff]
                  %330 = vst [vmem:[%s288 + $0xa0] sm:$0xff] %v329
                  %v331 = vld [vmem:[%s287 + $0x150] sm:$0xff]
                  %332 = vst [vmem:[%s288 + $0xa8] sm:$0xff] %v331
                  %v333 = vld [vmem:[%s287 + $0x160] sm:$0xff]
                  %334 = vst [vmem:[%s288 + $0xb0] sm:$0xff] %v333
                  %v335 = vld [vmem:[%s287 + $0x170] sm:$0xff]
                  %336 = vst [vmem:[%s288 + $0xb8] sm:$0xff] %v335
                  %v337 = vld [vmem:[%s287 + $0x180] sm:$0xff]
                  %338 = vst [vmem:[%s288 + $0xc0] sm:$0xff] %v337
                  %v339 = vld [vmem:[%s287 + $0x190] sm:$0xff]
                  %340 = vst [vmem:[%s288 + $0xc8] sm:$0xff] %v339
                  %v341 = vld [vmem:[%s287 + $0x1a0] sm:$0xff]
                  %342 = vst [vmem:[%s288 + $0xd0] sm:$0xff] %v341
                  %v343 = vld [vmem:[%s287 + $0x1b0] sm:$0xff]
                  %344 = vst [vmem:[%s288 + $0xd8] sm:$0xff] %v343
                  %v345 = vld [vmem:[%s287 + $0x1c0] sm:$0xff]
                  %346 = vst [vmem:[%s288 + $0xe0] sm:$0xff] %v345
                  %v347 = vld [vmem:[%s287 + $0x1d0] sm:$0xff]
                  %348 = vst [vmem:[%s288 + $0xe8] sm:$0xff] %v347
                  %v349 = vld [vmem:[%s287 + $0x1e0] sm:$0xff]
                  %350 = vst [vmem:[%s288 + $0xf0] sm:$0xff] %v349
                  %v351 = vld [vmem:[%s287 + $0x1f0] sm:$0xff]
                  %352 = vst [vmem:[%s288 + $0xf8] sm:$0xff] %v351
                  %v353 = vld [vmem:[%s287 + $0x200] sm:$0xff]
                  %354 = vst [vmem:[%s288 + $0x100] sm:$0xff] %v353
                  %v355 = vld [vmem:[%s287 + $0x210] sm:$0xff]
                  %356 = vst [vmem:[%s288 + $0x108] sm:$0xff] %v355
                  %v357 = vld [vmem:[%s287 + $0x220] sm:$0xff]
                  %358 = vst [vmem:[%s288 + $0x110] sm:$0xff] %v357
                  %v359 = vld [vmem:[%s287 + $0x230] sm:$0xff]
                  %360 = vst [vmem:[%s288 + $0x118] sm:$0xff] %v359
                  %v361 = vld [vmem:[%s287 + $0x240] sm:$0xff]
                  %362 = vst [vmem:[%s288 + $0x120] sm:$0xff] %v361
                  %v363 = vld [vmem:[%s287 + $0x250] sm:$0xff]
                  %364 = vst [vmem:[%s288 + $0x128] sm:$0xff] %v363
                  %v365 = vld [vmem:[%s287 + $0x260] sm:$0xff]
                  %366 = vst [vmem:[%s288 + $0x130] sm:$0xff] %v365
                  %v367 = vld [vmem:[%s287 + $0x270] sm:$0xff]
                  %368 = vst [vmem:[%s288 + $0x138] sm:$0xff] %v367
                  %v369 = vld [vmem:[%s287 + $0x280] sm:$0xff]
                  %370 = vst [vmem:[%s288 + $0x140] sm:$0xff] %v369
                  %v371 = vld [vmem:[%s287 + $0x290] sm:$0xff]
                  %372 = vst [vmem:[%s288 + $0x148] sm:$0xff] %v371
                  %v373 = vld [vmem:[%s287 + $0x2a0] sm:$0xff]
                  %374 = vst [vmem:[%s288 + $0x150] sm:$0xff] %v373
                  %v375 = vld [vmem:[%s287 + $0x2b0] sm:$0xff]
                  %376 = vst [vmem:[%s288 + $0x158] sm:$0xff] %v375
                  %v377 = vld [vmem:[%s287 + $0x2c0] sm:$0xff]
                  %378 = vst [vmem:[%s288 + $0x160] sm:$0xff] %v377
                  %v379 = vld [vmem:[%s287 + $0x2d0] sm:$0xff]
                  %380 = vst [vmem:[%s288 + $0x168] sm:$0xff] %v379
                  %v381 = vld [vmem:[%s287 + $0x2e0] sm:$0xff]
                  %382 = vst [vmem:[%s288 + $0x170] sm:$0xff] %v381
                  %v383 = vld [vmem:[%s287 + $0x2f0] sm:$0xff]
                  %384 = vst [vmem:[%s288 + $0x178] sm:$0xff] %v383
                  %v385 = vld [vmem:[%s287 + $0x300] sm:$0xff]
                  %386 = vst [vmem:[%s288 + $0x180] sm:$0xff] %v385
                  %v387 = vld [vmem:[%s287 + $0x310] sm:$0xff]
                  %388 = vst [vmem:[%s288 + $0x188] sm:$0xff] %v387
                  %v389 = vld [vmem:[%s287 + $0x320] sm:$0xff]
                  %390 = vst [vmem:[%s288 + $0x190] sm:$0xff] %v389
                  %v391 = vld [vmem:[%s287 + $0x330] sm:$0xff]
                  %392 = vst [vmem:[%s288 + $0x198] sm:$0xff] %v391
                  %v393 = vld [vmem:[%s287 + $0x340] sm:$0xff]
                  %394 = vst [vmem:[%s288 + $0x1a0] sm:$0xff] %v393
                  %v395 = vld [vmem:[%s287 + $0x350] sm:$0xff]
                  %396 = vst [vmem:[%s288 + $0x1a8] sm:$0xff] %v395
                $region56: #{downsample.1} parent=50 // loop_footer
                  %s286 = sadd.s32 1, %s282
                $region57: #{downsample.1} parent=50 // loop_footer_branch
                  %281 = sbr.rel target = $region53
                $region58: #{downsample.1} parent=50 // loop_exit
                  _
              $region51: #{downsample.1} parent=35 // pred_fallthru
                _
              // Predicated region
              $region59: #{downsample.1} parent=35 // pred_check
                _
              $region60: #{downsample.1} parent=35 // pred_check_branch
                %398 = sbr.rel target = $region62
              $region61: #{downsample.1} parent=35 // pred_region
                _
              $region62: #{downsample.1} parent=35 // pred_fallthru
                _
            $region36: #{downsample.1} parent=31 // pred_fallthru
              _
            // Predicated region
            $region37: #{downsample.1} parent=31 // pred_check
              _
            $region38: #{downsample.1} parent=31 // pred_check_branch
              %161 = sbr.rel target = $region40
            $region39: #{downsample.1} parent=31 // pred_region
              loop: start=0, step=1, limit=1
              $region41: #{downsample.1} parent=39 // loop_pre_header
                _
              $region42: #{downsample.1} parent=39 // loop_header
                %s164 = sphi 0, %s168
                %p165 = scmp.ge.s32.totalorder %s164, 1
                %s169 = sphi %s155, %s155
                %s170 = sphi %s150, %s150
              $region43: #{downsample.1} parent=39 // loop_header_branch
                %167 = sbr.rel (%p165) target = $region47
              $region44: #{downsample.1} parent=39 // loop_body
                %v171 = vld [vmem:[%s169] sm:$0xff]
                %172 = vst [vmem:[%s170] sm:$0xff] %v171
                %v173 = vld [vmem:[%s169 + $0x10] sm:$0xff]
                %174 = vst [vmem:[%s170 + $0x8] sm:$0xff] %v173
                %v175 = vld [vmem:[%s169 + $0x20] sm:$0xff]
                %176 = vst [vmem:[%s170 + $0x10] sm:$0xff] %v175
                %v177 = vld [vmem:[%s169 + $0x30] sm:$0xff]
                %178 = vst [vmem:[%s170 + $0x18] sm:$0xff] %v177
                %v179 = vld [vmem:[%s169 + $0x40] sm:$0xff]
                %180 = vst [vmem:[%s170 + $0x20] sm:$0xff] %v179
                %v181 = vld [vmem:[%s169 + $0x50] sm:$0xff]
                %182 = vst [vmem:[%s170 + $0x28] sm:$0xff] %v181
                %v183 = vld [vmem:[%s169 + $0x60] sm:$0xff]
                %184 = vst [vmem:[%s170 + $0x30] sm:$0xff] %v183
                %v185 = vld [vmem:[%s169 + $0x70] sm:$0xff]
                %186 = vst [vmem:[%s170 + $0x38] sm:$0xff] %v185
                %v187 = vld [vmem:[%s169 + $0x80] sm:$0xff]
                %188 = vst [vmem:[%s170 + $0x40] sm:$0xff] %v187
                %v189 = vld [vmem:[%s169 + $0x90] sm:$0xff]
                %190 = vst [vmem:[%s170 + $0x48] sm:$0xff] %v189
                %v191 = vld [vmem:[%s169 + $0xa0] sm:$0xff]
                %192 = vst [vmem:[%s170 + $0x50] sm:$0xff] %v191
                %v193 = vld [vmem:[%s169 + $0xb0] sm:$0xff]
                %194 = vst [vmem:[%s170 + $0x58] sm:$0xff] %v193
                %v195 = vld [vmem:[%s169 + $0xc0] sm:$0xff]
                %196 = vst [vmem:[%s170 + $0x60] sm:$0xff] %v195
                %v197 = vld [vmem:[%s169 + $0xd0] sm:$0xff]
                %198 = vst [vmem:[%s170 + $0x68] sm:$0xff] %v197
                %v199 = vld [vmem:[%s169 + $0xe0] sm:$0xff]
                %200 = vst [vmem:[%s170 + $0x70] sm:$0xff] %v199
                %v201 = vld [vmem:[%s169 + $0xf0] sm:$0xff]
                %202 = vst [vmem:[%s170 + $0x78] sm:$0xff] %v201
                %v203 = vld [vmem:[%s169 + $0x100] sm:$0xff]
                %204 = vst [vmem:[%s170 + $0x80] sm:$0xff] %v203
                %v205 = vld [vmem:[%s169 + $0x110] sm:$0xff]
                %206 = vst [vmem:[%s170 + $0x88] sm:$0xff] %v205
                %v207 = vld [vmem:[%s169 + $0x120] sm:$0xff]
                %208 = vst [vmem:[%s170 + $0x90] sm:$0xff] %v207
                %v209 = vld [vmem:[%s169 + $0x130] sm:$0xff]
                %210 = vst [vmem:[%s170 + $0x98] sm:$0xff] %v209
                %v211 = vld [vmem:[%s169 + $0x140] sm:$0xff]
                %212 = vst [vmem:[%s170 + $0xa0] sm:$0xff] %v211
                %v213 = vld [vmem:[%s169 + $0x150] sm:$0xff]
                %214 = vst [vmem:[%s170 + $0xa8] sm:$0xff] %v213
                %v215 = vld [vmem:[%s169 + $0x160] sm:$0xff]
                %216 = vst [vmem:[%s170 + $0xb0] sm:$0xff] %v215
                %v217 = vld [vmem:[%s169 + $0x170] sm:$0xff]
                %218 = vst [vmem:[%s170 + $0xb8] sm:$0xff] %v217
                %v219 = vld [vmem:[%s169 + $0x180] sm:$0xff]
                %220 = vst [vmem:[%s170 + $0xc0] sm:$0xff] %v219
                %v221 = vld [vmem:[%s169 + $0x190] sm:$0xff]
                %222 = vst [vmem:[%s170 + $0xc8] sm:$0xff] %v221
                %v223 = vld [vmem:[%s169 + $0x1a0] sm:$0xff]
                %224 = vst [vmem:[%s170 + $0xd0] sm:$0xff] %v223
                %v225 = vld [vmem:[%s169 + $0x1b0] sm:$0xff]
                %226 = vst [vmem:[%s170 + $0xd8] sm:$0xff] %v225
                %v227 = vld [vmem:[%s169 + $0x1c0] sm:$0xff]
                %228 = vst [vmem:[%s170 + $0xe0] sm:$0xff] %v227
                %v229 = vld [vmem:[%s169 + $0x1d0] sm:$0xff]
                %230 = vst [vmem:[%s170 + $0xe8] sm:$0xff] %v229
                %v231 = vld [vmem:[%s169 + $0x1e0] sm:$0xff]
                %232 = vst [vmem:[%s170 + $0xf0] sm:$0xff] %v231
                %v233 = vld [vmem:[%s169 + $0x1f0] sm:$0xff]
                %234 = vst [vmem:[%s170 + $0xf8] sm:$0xff] %v233
                %v235 = vld [vmem:[%s169 + $0x200] sm:$0xff]
                %236 = vst [vmem:[%s170 + $0x100] sm:$0xff] %v235
                %v237 = vld [vmem:[%s169 + $0x210] sm:$0xff]
                %238 = vst [vmem:[%s170 + $0x108] sm:$0xff] %v237
                %v239 = vld [vmem:[%s169 + $0x220] sm:$0xff]
                %240 = vst [vmem:[%s170 + $0x110] sm:$0xff] %v239
                %v241 = vld [vmem:[%s169 + $0x230] sm:$0xff]
                %242 = vst [vmem:[%s170 + $0x118] sm:$0xff] %v241
                %v243 = vld [vmem:[%s169 + $0x240] sm:$0xff]
                %244 = vst [vmem:[%s170 + $0x120] sm:$0xff] %v243
                %v245 = vld [vmem:[%s169 + $0x250] sm:$0xff]
                %246 = vst [vmem:[%s170 + $0x128] sm:$0xff] %v245
                %v247 = vld [vmem:[%s169 + $0x260] sm:$0xff]
                %248 = vst [vmem:[%s170 + $0x130] sm:$0xff] %v247
                %v249 = vld [vmem:[%s169 + $0x270] sm:$0xff]
                %250 = vst [vmem:[%s170 + $0x138] sm:$0xff] %v249
                %v251 = vld [vmem:[%s169 + $0x280] sm:$0xff]
                %252 = vst [vmem:[%s170 + $0x140] sm:$0xff] %v251
                %v253 = vld [vmem:[%s169 + $0x290] sm:$0xff]
                %254 = vst [vmem:[%s170 + $0x148] sm:$0xff] %v253
                %v255 = vld [vmem:[%s169 + $0x2a0] sm:$0xff]
                %256 = vst [vmem:[%s170 + $0x150] sm:$0xff] %v255
                %v257 = vld [vmem:[%s169 + $0x2b0] sm:$0xff]
                %258 = vst [vmem:[%s170 + $0x158] sm:$0xff] %v257
                %v259 = vld [vmem:[%s169 + $0x2c0] sm:$0xff]
                %260 = vst [vmem:[%s170 + $0x160] sm:$0xff] %v259
                %v261 = vld [vmem:[%s169 + $0x2d0] sm:$0xff]
                %262 = vst [vmem:[%s170 + $0x168] sm:$0xff] %v261
                %v263 = vld [vmem:[%s169 + $0x2e0] sm:$0xff]
                %264 = vst [vmem:[%s170 + $0x170] sm:$0xff] %v263
                %v265 = vld [vmem:[%s169 + $0x2f0] sm:$0xff]
                %266 = vst [vmem:[%s170 + $0x178] sm:$0xff] %v265
                %v267 = vld [vmem:[%s169 + $0x300] sm:$0xff]
                %268 = vst [vmem:[%s170 + $0x180] sm:$0xff] %v267
                %v269 = vld [vmem:[%s169 + $0x310] sm:$0xff]
                %270 = vst [vmem:[%s170 + $0x188] sm:$0xff] %v269
                %v271 = vld [vmem:[%s169 + $0x320] sm:$0xff]
                %272 = vst [vmem:[%s170 + $0x190] sm:$0xff] %v271
                %v273 = vld [vmem:[%s169 + $0x330] sm:$0xff]
                %274 = vst [vmem:[%s170 + $0x198] sm:$0xff] %v273
                %v275 = vld [vmem:[%s169 + $0x340] sm:$0xff]
                %276 = vst [vmem:[%s170 + $0x1a0] sm:$0xff] %v275
                %v277 = vld [vmem:[%s169 + $0x350] sm:$0xff]
                %278 = vst [vmem:[%s170 + $0x1a8] sm:$0xff] %v277
              $region45: #{downsample.1} parent=39 // loop_footer
                %s168 = sadd.s32 1, %s164
              $region46: #{downsample.1} parent=39 // loop_footer_branch
                %163 = sbr.rel target = $region42
              $region47: #{downsample.1} parent=39 // loop_exit
                _
            $region40: #{downsample.1} parent=31 // pred_fallthru
              _
          $region32: #{downsample.1} parent=27 // pred_fallthru
            _
          %399 = vnop
        $region28: #{downsample.1} parent=23 // pred_fallthru
          _
      $region24: #{downsample.1} parent=5 // pred_fallthru
        _
      %p400 = scmp.le.s32.totalorder 1, %s9
      %p401 = scmp.lt.s32.totalorder %s9, 5
      %p402 = pnand %p400, %p401
      %p403 = pneg %p402
      // Predicated region
      $region63: #{downsample.1} parent=5 // pred_check
        _
      $region64: #{downsample.1} parent=5 // pred_check_branch
        %405 = sbr.rel (%p402) target = $region66
      $region65: #{downsample.1} parent=5 // pred_region
        %s406 = ssub.s32 %s9, 1
        %s407 = sand.u32 %s36, 1
        %s408 = sand.u32 %s36, 1
        %s409 = smul.addr %s408, 432
        %s410 = scalar_lea.vmem [#allocation2], %s409
        // Predicated region
        $region67: #{downsample.1} parent=65 // pred_check
          %p411 = pneg %p49
        $region68: #{downsample.1} parent=65 // pred_check_branch
          %413 = sbr.rel (%p411) target = $region70
        $region69: #{downsample.1} parent=65 // pred_region
          _
        $region70: #{downsample.1} parent=65 // pred_fallthru
          _
        %s414 = sand.u32 %s36, 1
        %s415 = sand.u32 %s36, 1
        %s416 = smul.addr %s415, 432
        %s417 = scalar_lea.vmem [#allocation2], %s416
        %p418 = pneg %p49
        %p419 = pneg %p46
        %p420 = pneg %p70
        %p421 = pneg %p67
        %p422 = pneg %p91
        %p423 = pneg %p88
        %p424 = pneg %p119
        %p425 = pneg %p116
        %s426 = sand.u32 %s106, 1
        %s427 = sand.u32 %s106, 1
        %s428 = smul.addr %s427, 32
        %s429 = scalar_lea.vmem [#allocation3], %s428
        %s430 = smul.u32 2, %s19
        %s431 = smul.u32 2, %s19
        %v433 = vld [vmem:[%s1] sm:$0xff]
        %v434 = vld [vmem:[%s1 + $0x8] sm:$0xff]
        %v435 = vld [vmem:[%s1 + $0x10] sm:$0xff]
        %v436 = vld [vmem:[%s1 + $0x18] sm:$0xff]
        %v437 = vld [vmem:[%s410] sm:$0xff]
        %v438 = vld [vmem:[%s410 + $0x8] sm:$0xff]
        %v439 = vld [vmem:[%s410 + $0x10] sm:$0xff]
        %v440 = vld [vmem:[%s410 + $0x18] sm:$0xff]
        %v441 = vld [vmem:[%s410 + $0x20] sm:$0xff]
        %v442 = vld [vmem:[%s410 + $0x28] sm:$0xff]
        %v443 = vld [vmem:[%s410 + $0x30] sm:$0xff]
        %v444 = vld [vmem:[%s410 + $0x38] sm:$0xff]
        %v445 = vld [vmem:[%s410 + $0x40] sm:$0xff]
        %v446 = vld [vmem:[%s410 + $0x48] sm:$0xff]
        %v447 = vld [vmem:[%s410 + $0x50] sm:$0xff]
        %v448 = vld [vmem:[%s410 + $0x58] sm:$0xff]
        %v449 = vld [vmem:[%s410 + $0x60] sm:$0xff]
        %v450 = vld [vmem:[%s410 + $0x68] sm:$0xff]
        %v451 = vld [vmem:[%s410 + $0x70] sm:$0xff]
        %v452 = vld [vmem:[%s410 + $0x78] sm:$0xff]
        %v453 = vld [vmem:[%s410 + $0x80] sm:$0xff]
        %v454 = vld [vmem:[%s410 + $0x88] sm:$0xff]
        %v455 = vld [vmem:[%s410 + $0x90] sm:$0xff]
        %v456 = vld [vmem:[%s410 + $0x98] sm:$0xff]
        %v457 = vld [vmem:[%s410 + $0xa0] sm:$0xff]
        %v458 = vld [vmem:[%s410 + $0xa8] sm:$0xff]
        %v459 = vld [vmem:[%s410 + $0xb0] sm:$0xff]
        %v460 = vld [vmem:[%s410 + $0xb8] sm:$0xff]
        %v461 = vld [vmem:[%s410 + $0xc0] sm:$0xff]
        %v462 = vld [vmem:[%s410 + $0xc8] sm:$0xff]
        %v463 = vld [vmem:[%s410 + $0xd0] sm:$0xff]
        %v464 = vld [vmem:[%s410 + $0xd8] sm:$0xff]
        %v465 = vld [vmem:[%s410 + $0xe0] sm:$0xff]
        %v466 = vld [vmem:[%s410 + $0xe8] sm:$0xff]
        %v467 = vld [vmem:[%s410 + $0xf0] sm:$0xff]
        %v468 = vld [vmem:[%s410 + $0xf8] sm:$0xff]
        %v469 = vld [vmem:[%s410 + $0x100] sm:$0xff]
        %v470 = vld [vmem:[%s410 + $0x108] sm:$0xff]
        %v471 = vld [vmem:[%s410 + $0x110] sm:$0xff]
        %v472 = vld [vmem:[%s410 + $0x118] sm:$0xff]
        %v473 = vld [vmem:[%s410 + $0x120] sm:$0xff]
        %v474 = vld [vmem:[%s410 + $0x128] sm:$0xff]
        %v475 = vld [vmem:[%s410 + $0x130] sm:$0xff]
        %v476 = vld [vmem:[%s410 + $0x138] sm:$0xff]
        %v477 = vld [vmem:[%s410 + $0x140] sm:$0xff]
        %v478 = vld [vmem:[%s410 + $0x148] sm:$0xff]
        %v479 = vld [vmem:[%s410 + $0x150] sm:$0xff]
        %v480 = vld [vmem:[%s410 + $0x158] sm:$0xff]
        %v481 = vld [vmem:[%s410 + $0x160] sm:$0xff]
        %v482 = vld [vmem:[%s410 + $0x168] sm:$0xff]
        %v483 = vld [vmem:[%s410 + $0x170] sm:$0xff]
        %v484 = vld [vmem:[%s410 + $0x178] sm:$0xff]
        %v485 = vld [vmem:[%s410 + $0x180] sm:$0xff]
        %v486 = vld [vmem:[%s410 + $0x188] sm:$0xff]
        %v487 = vld [vmem:[%s410 + $0x190] sm:$0xff]
        %v488 = vld [vmem:[%s410 + $0x198] sm:$0xff]
        %v489 = vld [vmem:[%s410 + $0x1a0] sm:$0xff]
        %v490 = vld [vmem:[%s410 + $0x1a8] sm:$0xff]
        %v491 = vld [vmem:[%s2] sm:$0xff]
        %v492 = vld [vmem:[%s2 + $0x8] sm:$0xff]
        %494 = vset.pattern.permute.xlu0 0
        %495 = vperm.xlu0 %494, %v491
        %v496 = vpop.permute.xlu0 %495
        %499 = vset.pattern.permute.xlu0 0
        %500 = vperm.xlu0 %499, %v492
        %v501 = vpop.permute.xlu0 %500
        %v507 = vunpack.c.l.b16 %v433
        %v508 = vunpack.c.h.b16 %v433
        %v509 = vunpack.c.l.b16 %v434
        %v510 = vunpack.c.h.b16 %v434
        %v511 = vunpack.c.l.b16 %v435
        %v512 = vunpack.c.h.b16 %v435
        %v513 = vunpack.c.l.b16 %v436
        %v514 = vunpack.c.h.b16 %v436
        %v515 = vpack.c.b16 %v511, %v507
        %v516 = vpack.c.b16 %v512, %v508
        %v517 = vpack.c.b16 %v513, %v509
        %v518 = vpack.c.b16 %v514, %v510
        %v576 = vunpack.c.l.b16 %v437
        %v577 = vunpack.c.h.b16 %v437
        %v578 = vunpack.c.l.b16 %v438
        %v579 = vunpack.c.h.b16 %v438
        %v580 = vunpack.c.l.b16 %v439
        %v581 = vunpack.c.h.b16 %v439
        %v582 = vunpack.c.l.b16 %v440
        %v583 = vunpack.c.h.b16 %v440
        %v584 = vunpack.c.l.b16 %v441
        %v585 = vunpack.c.h.b16 %v441
        %v586 = vunpack.c.l.b16 %v442
        %v587 = vunpack.c.h.b16 %v442
        %v588 = vunpack.c.l.b16 %v443
        %v589 = vunpack.c.h.b16 %v443
        %v590 = vunpack.c.l.b16 %v444
        %v591 = vunpack.c.h.b16 %v444
        %v592 = vunpack.c.l.b16 %v445
        %v593 = vunpack.c.h.b16 %v445
        %v594 = vunpack.c.l.b16 %v446
        %v595 = vunpack.c.h.b16 %v446
        %v596 = vunpack.c.l.b16 %v447
        %v597 = vunpack.c.h.b16 %v447
        %v598 = vunpack.c.l.b16 %v448
        %v599 = vunpack.c.h.b16 %v448
        %v600 = vunpack.c.l.b16 %v449
        %v601 = vunpack.c.h.b16 %v449
        %v602 = vunpack.c.l.b16 %v450
        %v603 = vunpack.c.h.b16 %v450
        %v604 = vunpack.c.l.b16 %v451
        %v605 = vunpack.c.h.b16 %v451
        %v606 = vunpack.c.l.b16 %v452
        %v607 = vunpack.c.h.b16 %v452
        %v608 = vunpack.c.l.b16 %v453
        %v609 = vunpack.c.h.b16 %v453
        %v610 = vunpack.c.l.b16 %v454
        %v611 = vunpack.c.h.b16 %v454
        %v612 = vunpack.c.l.b16 %v455
        %v613 = vunpack.c.h.b16 %v455
        %v614 = vunpack.c.l.b16 %v456
        %v615 = vunpack.c.h.b16 %v456
        %v616 = vunpack.c.l.b16 %v457
        %v617 = vunpack.c.h.b16 %v457
        %v618 = vunpack.c.l.b16 %v458
        %v619 = vunpack.c.h.b16 %v458
        %v620 = vunpack.c.l.b16 %v459
        %v621 = vunpack.c.h.b16 %v459
        %v622 = vunpack.c.l.b16 %v460
        %v623 = vunpack.c.h.b16 %v460
        %v624 = vunpack.c.l.b16 %v461
        %v625 = vunpack.c.h.b16 %v461
        %v626 = vunpack.c.l.b16 %v462
        %v627 = vunpack.c.h.b16 %v462
        %v628 = vunpack.c.l.b16 %v463
        %v629 = vunpack.c.h.b16 %v463
        %v630 = vunpack.c.l.b16 %v464
        %v631 = vunpack.c.h.b16 %v464
        %v632 = vunpack.c.l.b16 %v465
        %v633 = vunpack.c.h.b16 %v465
        %v634 = vunpack.c.l.b16 %v466
        %v635 = vunpack.c.h.b16 %v466
        %v636 = vunpack.c.l.b16 %v467
        %v637 = vunpack.c.h.b16 %v467
        %v638 = vunpack.c.l.b16 %v468
        %v639 = vunpack.c.h.b16 %v468
        %v640 = vunpack.c.l.b16 %v469
        %v641 = vunpack.c.h.b16 %v469
        %v642 = vunpack.c.l.b16 %v470
        %v643 = vunpack.c.h.b16 %v470
        %v644 = vunpack.c.l.b16 %v471
        %v645 = vunpack.c.h.b16 %v471
        %v646 = vunpack.c.l.b16 %v472
        %v647 = vunpack.c.h.b16 %v472
        %v648 = vunpack.c.l.b16 %v473
        %v649 = vunpack.c.h.b16 %v473
        %v650 = vunpack.c.l.b16 %v474
        %v651 = vunpack.c.h.b16 %v474
        %v652 = vunpack.c.l.b16 %v475
        %v653 = vunpack.c.h.b16 %v475
        %v654 = vunpack.c.l.b16 %v476
        %v655 = vunpack.c.h.b16 %v476
        %v656 = vunpack.c.l.b16 %v477
        %v657 = vunpack.c.h.b16 %v477
        %v658 = vunpack.c.l.b16 %v478
        %v659 = vunpack.c.h.b16 %v478
        %v660 = vunpack.c.l.b16 %v479
        %v661 = vunpack.c.h.b16 %v479
        %v662 = vunpack.c.l.b16 %v480
        %v663 = vunpack.c.h.b16 %v480
        %v664 = vunpack.c.l.b16 %v481
        %v665 = vunpack.c.h.b16 %v481
        %v666 = vunpack.c.l.b16 %v482
        %v667 = vunpack.c.h.b16 %v482
        %v668 = vunpack.c.l.b16 %v483
        %v669 = vunpack.c.h.b16 %v483
        %v670 = vunpack.c.l.b16 %v484
        %v671 = vunpack.c.h.b16 %v484
        %v672 = vunpack.c.l.b16 %v485
        %v673 = vunpack.c.h.b16 %v485
        %v674 = vunpack.c.l.b16 %v486
        %v675 = vunpack.c.h.b16 %v486
        %v676 = vunpack.c.l.b16 %v487
        %v677 = vunpack.c.h.b16 %v487
        %v678 = vunpack.c.l.b16 %v488
        %v679 = vunpack.c.h.b16 %v488
        %v680 = vunpack.c.l.b16 %v489
        %v681 = vunpack.c.h.b16 %v489
        %v682 = vunpack.c.l.b16 %v490
        %v683 = vunpack.c.h.b16 %v490
        %v684 = vpack.c.b16 %v578, %v576
        %v685 = vpack.c.b16 %v579, %v577
        %v686 = vpack.c.b16 %v582, %v580
        %v687 = vpack.c.b16 %v583, %v581
        %v688 = vpack.c.b16 %v586, %v584
        %v689 = vpack.c.b16 %v587, %v585
        %v690 = vpack.c.b16 %v590, %v588
        %v691 = vpack.c.b16 %v591, %v589
        %v692 = vpack.c.b16 %v594, %v592
        %v693 = vpack.c.b16 %v595, %v593
        %v694 = vpack.c.b16 %v598, %v596
        %v695 = vpack.c.b16 %v599, %v597
        %v696 = vpack.c.b16 %v602, %v600
        %v697 = vpack.c.b16 %v603, %v601
        %v698 = vpack.c.b16 %v606, %v604
        %v699 = vpack.c.b16 %v607, %v605
        %v700 = vpack.c.b16 %v610, %v608
        %v701 = vpack.c.b16 %v611, %v609
        %v702 = vpack.c.b16 %v614, %v612
        %v703 = vpack.c.b16 %v615, %v613
        %v704 = vpack.c.b16 %v618, %v616
        %v705 = vpack.c.b16 %v619, %v617
        %v706 = vpack.c.b16 %v622, %v620
        %v707 = vpack.c.b16 %v623, %v621
        %v708 = vpack.c.b16 %v626, %v624
        %v709 = vpack.c.b16 %v627, %v625
        %v710 = vpack.c.b16 %v630, %v628
        %v711 = vpack.c.b16 %v631, %v629
        %v712 = vpack.c.b16 %v634, %v632
        %v713 = vpack.c.b16 %v635, %v633
        %v714 = vpack.c.b16 %v638, %v636
        %v715 = vpack.c.b16 %v639, %v637
        %v716 = vpack.c.b16 %v642, %v640
        %v717 = vpack.c.b16 %v643, %v641
        %v718 = vpack.c.b16 %v646, %v644
        %v719 = vpack.c.b16 %v647, %v645
        %v720 = vpack.c.b16 %v650, %v648
        %v721 = vpack.c.b16 %v651, %v649
        %v722 = vpack.c.b16 %v654, %v652
        %v723 = vpack.c.b16 %v655, %v653
        %v724 = vpack.c.b16 %v658, %v656
        %v725 = vpack.c.b16 %v659, %v657
        %v726 = vpack.c.b16 %v662, %v660
        %v727 = vpack.c.b16 %v663, %v661
        %v728 = vpack.c.b16 %v666, %v664
        %v729 = vpack.c.b16 %v667, %v665
        %v730 = vpack.c.b16 %v670, %v668
        %v731 = vpack.c.b16 %v671, %v669
        %v732 = vpack.c.b16 %v674, %v672
        %v733 = vpack.c.b16 %v675, %v673
        %v734 = vpack.c.b16 %v678, %v676
        %v735 = vpack.c.b16 %v679, %v677
        %v736 = vpack.c.b16 %v682, %v680
        %v737 = vpack.c.b16 %v683, %v681
        %vm792 = vcmask 392192
        %v794 = vsel %vm792, %v518, 0
        %796 = vmatprep.subr.bf16.mxu0 %v685
        %797 = vmatpush1.bf16.msra.mxu0 %v684
        %798 = vmatprep.subr.bf16.mxu0 %v687
        %799 = vmatpush1.bf16.msra.mxu0 %v686
        %800 = vmatprep.subr.bf16.mxu0 %v689
        %801 = vmatpush1.bf16.msra.mxu0 %v688
        %802 = vmatprep.subr.bf16.mxu0 %v691
        %803 = vmatpush1.bf16.msra.mxu0 %v690
        %804 = vmatprep.subr.bf16.mxu0 %v693
        %805 = vmatpush1.bf16.msra.mxu0 %v692
        %806 = vmatprep.subr.bf16.mxu0 %v695
        %807 = vmatpush1.bf16.msra.mxu0 %v694
        %808 = vmatprep.subr.bf16.mxu0 %v697
        %809 = vmatpush1.bf16.msra.mxu0 %v696
        %810 = vmatprep.subr.bf16.mxu0 %v699
        %811 = vmatpush1.bf16.msra.mxu0 %v698
        %812 = vmatprep.subr.bf16.mxu0 %v701
        %813 = vmatpush1.bf16.msra.mxu0 %v700
        %814 = vmatprep.subr.bf16.mxu0 %v703
        %815 = vmatpush1.bf16.msra.mxu0 %v702
        %816 = vmatprep.subr.bf16.mxu0 %v705
        %817 = vmatpush1.bf16.msra.mxu0 %v704
        %818 = vmatprep.subr.bf16.mxu0 %v707
        %819 = vmatpush1.bf16.msra.mxu0 %v706
        %820 = vmatprep.subr.bf16.mxu0 %v709
        %821 = vmatpush1.bf16.msra.mxu0 %v708
        %822 = vmatprep.subr.bf16.mxu0 %v711
        %823 = vmatpush1.bf16.msra.mxu0 %v710
        %824 = vmatprep.subr.bf16.mxu0 %v713
        %825 = vmatpush1.bf16.msra.mxu0 %v712
        %826 = vmatprep.subr.bf16.mxu0 %v715
        %827 = vmatpush1.bf16.msra.mxu0 %v714
        %828 = vmatprep.mubr.bf16.mxu0 %v516
        %829 = vmatmul.mubr.bf16.gmra.mrb[0].mxu0 %v515
        %v830 = vpop.f32.mrb[0].mxu0
        %v831 = vadd.f32 %v496, %v830
        %v832 = vpop.f32.mrb[0].mxu0
        %v833 = vadd.f32 %v496, %v832
        %v834 = vpop.f32.mrb[0].mxu0
        %v835 = vadd.f32 %v501, %v834
        %v836 = vpop.f32.mrb[0].mxu0
        %v837 = vadd.f32 %v501, %v836
        %838 = vdwg.mxu0
        %839 = vmatprep.subr.bf16.mxu0 %v717
        %840 = vmatpush1.bf16.msra.mxu0 %v716
        %841 = vmatprep.subr.bf16.mxu0 %v719
        %842 = vmatpush1.bf16.msra.mxu0 %v718
        %843 = vmatprep.subr.bf16.mxu0 %v721
        %844 = vmatpush1.bf16.msra.mxu0 %v720
        %845 = vmatprep.subr.bf16.mxu0 %v723
        %846 = vmatpush1.bf16.msra.mxu0 %v722
        %847 = vmatprep.subr.bf16.mxu0 %v725
        %848 = vmatpush1.bf16.msra.mxu0 %v724
        %849 = vmatprep.subr.bf16.mxu0 %v727
        %850 = vmatpush1.bf16.msra.mxu0 %v726
        %851 = vmatprep.subr.bf16.mxu0 %v729
        %852 = vmatpush1.bf16.msra.mxu0 %v728
        %853 = vmatprep.subr.bf16.mxu0 %v731
        %854 = vmatpush1.bf16.msra.mxu0 %v730
        %855 = vmatprep.subr.bf16.mxu0 %v733
        %856 = vmatpush1.bf16.msra.mxu0 %v732
        %857 = vmatprep.subr.bf16.mxu0 %v735
        %858 = vmatpush1.bf16.msra.mxu0 %v734
        %859 = vmatprep.subr.bf16.mxu0 %v737
        %860 = vmatpush1.bf16.msra.mxu0 %v736
        %861 = vmatprep.subr.bf16.mxu0 0
        %862 = vmatpush1.bf16.msra.mxu0 0
        %863 = vmatprep.subr.bf16.mxu0 0
        %864 = vmatpush1.bf16.msra.mxu0 0
        %865 = vmatprep.subr.bf16.mxu0 0
        %866 = vmatpush1.bf16.msra.mxu0 0
        %867 = vmatprep.subr.bf16.mxu0 0
        %868 = vmatpush1.bf16.msra.mxu0 0
        %869 = vmatprep.subr.bf16.mxu0 0
        %870 = vmatpush1.bf16.msra.mxu0 0
        %871 = vmatprep.mubr.bf16.mxu0 %v794
        %872 = vmatmul.mubr.bf16.gmra.mrb[0].mxu0 %v517
        %v873 = vpop.f32.mrb[0].mxu0
        %v874 = vadd.f32 %v831, %v873
        %v875 = vpop.f32.mrb[0].mxu0
        %v876 = vadd.f32 %v833, %v875
        %v877 = vpop.f32.mrb[0].mxu0
        %v878 = vadd.f32 %v835, %v877
        %v879 = vpop.f32.mrb[0].mxu0
        %v880 = vadd.f32 %v837, %v879
        %881 = vdwg.mxu0
        %882 = vst [vmem:[%s429] sm:$0xff] %v874
        %883 = vst [vmem:[%s429 + $0x8] sm:$0xff] %v876
        %884 = vst [vmem:[%s429 + $0x10] sm:$0xff] %v878
        %885 = vst [vmem:[%s429 + $0x18] sm:$0xff] %v880
        %s886 = sand.u32 %s106, 1
        %s887 = sand.u32 %s106, 1
        %s888 = smul.addr %s887, 32
        %s889 = scalar_lea.vmem [#allocation3], %s888
        // Predicated region
        $region71: #{downsample.1} parent=65 // pred_check
          %p890 = pneg %p116
        $region72: #{downsample.1} parent=65 // pred_check_branch
          %892 = sbr.rel (%p890) target = $region74
        $region73: #{downsample.1} parent=65 // pred_region
          %s893 = smul.u32 2, %s19
          %s894 = smul.addr %s18, 8
          %s895 = sadd.s32 %s893, %s894
          %s896 = smul.addr %s895, 8
          %s897 = scalar_lea.vmem %s3, %s896
          // Predicated region
          $region75: #{downsample.1} parent=73 // pred_check
            _
          $region76: #{downsample.1} parent=73 // pred_check_branch
            %899 = sbr.rel (0) target = $region78
          $region77: #{downsample.1} parent=73 // pred_region
            // Predicated region
            $region79: #{downsample.1} parent=77 // pred_check
              _
            $region80: #{downsample.1} parent=77 // pred_check_branch
              %901 = sbr.rel (0) target = $region82
            $region81: #{downsample.1} parent=77 // pred_region
              loop: start=0, step=1, limit=1
              $region83: #{downsample.1} parent=81 // loop_pre_header
                _
              $region84: #{downsample.1} parent=81 // loop_header
                %s903 = sphi 0, %s907
                %p904 = scmp.ge.s32.totalorder %s903, 1
                %s908 = sphi %s889, %s889
                %s909 = sphi %s897, %s897
              $region85: #{downsample.1} parent=81 // loop_header_branch
                %906 = sbr.rel (%p904) target = $region89
              $region86: #{downsample.1} parent=81 // loop_body
                %v910 = vld [vmem:[%s908] sm:$0xff]
                %911 = vst [vmem:[%s909] sm:$0xff] %v910
                %v912 = vld [vmem:[%s908 + $0x8] sm:$0xff]
                %913 = vst [vmem:[%s909 + $0x8] sm:$0xff] %v912
                %v914 = vld [vmem:[%s908 + $0x10] sm:$0xff]
                %915 = vst [vmem:[%s909 + $0x20] sm:$0xff] %v914
                %v916 = vld [vmem:[%s908 + $0x18] sm:$0xff]
                %917 = vst [vmem:[%s909 + $0x28] sm:$0xff] %v916
              $region87: #{downsample.1} parent=81 // loop_footer
                %s907 = sadd.s32 1, %s903
              $region88: #{downsample.1} parent=81 // loop_footer_branch
                %902 = sbr.rel target = $region84
              $region89: #{downsample.1} parent=81 // loop_exit
                _
            $region82: #{downsample.1} parent=77 // pred_fallthru
              _
            // Predicated region
            $region90: #{downsample.1} parent=77 // pred_check
              _
            $region91: #{downsample.1} parent=77 // pred_check_branch
              %919 = sbr.rel target = $region93
            $region92: #{downsample.1} parent=77 // pred_region
              _
            $region93: #{downsample.1} parent=77 // pred_fallthru
              _
          $region78: #{downsample.1} parent=73 // pred_fallthru
            _
          %920 = vnop
        $region74: #{downsample.1} parent=65 // pred_fallthru
          _
      $region66: #{downsample.1} parent=5 // pred_fallthru
        _
      %p921 = scmp.le.s32.totalorder 2, %s9
      // Predicated region
      $region94: #{downsample.1} parent=5 // pred_check
        %p922 = pneg %p921
      $region95: #{downsample.1} parent=5 // pred_check_branch
        %924 = sbr.rel (%p922) target = $region97
      $region96: #{downsample.1} parent=5 // pred_region
        %s925 = ssub.s32 %s9, 2
        // Predicated region
        $region98: #{downsample.1} parent=96 // pred_check
          %p926 = pneg %p122
        $region99: #{downsample.1} parent=96 // pred_check_branch
          %928 = sbr.rel (%p926) target = $region101
        $region100: #{downsample.1} parent=96 // pred_region
          %s929 = sand.u32 %s107, 1
          %s930 = sand.u32 %s107, 1
          %s931 = smul.addr %s930, 32
          %s932 = scalar_lea.vmem [#allocation3], %s931
        $region101: #{downsample.1} parent=96 // pred_fallthru
          _
      $region97: #{downsample.1} parent=5 // pred_fallthru
        _
    $region6: #{downsample.1} parent=1 // loop_footer
      %s13 = sadd.s32 1, %s9
    $region7: #{downsample.1} parent=1 // loop_footer_branch
      %8 = sbr.rel target = $region3
    $region8: #{downsample.1} parent=1 // loop_exit
      _

</llo_original>
